<compile_context>
chip_gen: v5e
topology: v5e:2x2
jax: 0.10.0
libtpu: 0.0.40
codegen_flags: <defaults>
</compile_context>

<pallas_src>
import jax
import jax.numpy as jnp
from jax.experimental import pallas as pl
from jax.experimental.pallas import tpu as pltpu

HIDDEN = 32


def decoder_kernel(x_ref, w1_ref, b1_ref, w2_ref, b2_ref, w3_ref, b3_ref, o_ref):
    # x_ref: (TB, D) f32 (streamed) ; w*: bf16 (resident) ; b*: (1, n) f32 ;
    # o_ref: (TB, L) f32
    x = x_ref[...].astype(jnp.bfloat16)  # VPU cast, hidden under the x-tile DMA
    h1 = jnp.dot(x, w1_ref[...], preferred_element_type=jnp.float32) + b1_ref[...]
    h1 = jnp.maximum(h1, 0.0).astype(jnp.bfloat16)          # ReLU in f32, bf16 for MXU
    h2 = jnp.dot(h1, w2_ref[...], preferred_element_type=jnp.float32) + b2_ref[...]
    h2 = jnp.maximum(h2, 0.0).astype(jnp.bfloat16)
    o_ref[...] = (jnp.dot(h2, w3_ref[...], preferred_element_type=jnp.float32)
                  + b3_ref[...]).astype(o_ref.dtype)


def _pick_batch_tile(B, D):
    # Target ~4 MiB per f32 x buffer; with auto double-buffering that is ~8 MiB
    # for the x stream, comfortably under the default scoped-VMEM limit on every
    # generation (v5e 16 MiB, v6e/v7x 32 MiB) while keeping the streamed tile
    # large enough (>= several hundred rows at D ~ 1k) to sit near the HBM
    # roofline.  Capped at 1024 rows.
    budget = 4 * 1024 * 1024
    tb = max(8, min(1024, (budget // (D * 4)) // 8 * 8))
    if B <= tb:
        return B      # block == full batch dim: always a legal block shape
    return tb         # multiple of 8; Pallas handles the partial last block


def decoder_forward(x, params):
    """x: (B, C, H, W) float32. Returns (B, latent_size) float32."""
    w1, b1, w2, b2, w3, b3 = params
    B = x.shape[0]
    D = w1.shape[0]
    L = w3.shape[1]

    # nn.Flatten: row-major merge of the non-batch dims (layout-preserving).
    x_flat = x.reshape(B, D)

    # Weights are tiny (D*32 elements max); pre-casting them to bf16 is a
    # negligible one-time op.  x deliberately stays f32 in HBM (see header).
    w1_bf = w1.astype(jnp.bfloat16)
    w2_bf = w2.astype(jnp.bfloat16)
    w3_bf = w3.astype(jnp.bfloat16)

    tb = _pick_batch_tile(B, D)
    grid = (pl.cdiv(B, tb),)

    def resident(shape):
        # Constant block index -> DMA'd once, stays in VMEM for all grid steps.
        return pl.BlockSpec(shape, lambda i: (0, 0))

    flops = 2 * B * (D * HIDDEN + HIDDEN * HIDDEN + HIDDEN * L)
    bytes_accessed = (B * D * 4 + B * L * 4
                      + (D * HIDDEN + HIDDEN * HIDDEN + HIDDEN * L) * 2
                      + (HIDDEN + HIDDEN + L) * 4)

    return pl.pallas_call(
        decoder_kernel,
        out_shape=jax.ShapeDtypeStruct((B, L), jnp.float32),
        grid=grid,
        in_specs=[
            pl.BlockSpec((tb, D), lambda i: (i, 0)),   # streamed f32 x tiles
            resident((D, HIDDEN)),                     # w1 (bf16)
            resident((1, HIDDEN)),                     # b1 (f32)
            resident((HIDDEN, HIDDEN)),                # w2 (bf16)
            resident((1, HIDDEN)),                     # b2 (f32)
            resident((HIDDEN, L)),                     # w3 (bf16)
            resident((1, L)),                          # b3 (f32)
        ],
        out_specs=pl.BlockSpec((tb, L), lambda i: (i, 0)),
        compiler_params=pltpu.CompilerParams(
            dimension_semantics=("parallel",),         # shard batch tiles across TCs (v7x)
        ),
        cost_estimate=pl.CostEstimate(
            flops=flops, transcendentals=0, bytes_accessed=bytes_accessed),
    )(x_flat, w1_bf, b1, w2_bf, b2, w3_bf, b3)


def init_params(key, in_features, latent_size, hidden=HIDDEN):
    """Deterministic init mirroring nn.Linear's U(-1/sqrt(fan_in), 1/sqrt(fan_in))."""
    ks = jax.random.split(key, 6)

    def linear(kw, kb, fan_in, fan_out):
        bound = 1.0 / jnp.sqrt(fan_in)
        w = jax.random.uniform(kw, (fan_in, fan_out), jnp.float32, -bound, bound)
        b = jax.random.uniform(kb, (1, fan_out), jnp.float32, -bound, bound)
        return w, b

    w1, b1 = linear(ks[0], ks[1], in_features, hidden)
    w2, b2 = linear(ks[2], ks[3], hidden, hidden)
    w3, b3 = linear(ks[4], ks[5], hidden, latent_size)
    return (w1, b1, w2, b2, w3, b3)


def reference_forward(x, params, compute_dtype=jnp.float32):
    """Pure-JAX reference of the PyTorch Decoder forward.

    compute_dtype=jnp.bfloat16 mirrors the kernel's bf16-operand / f32-accum math.
    """
    w1, b1, w2, b2, w3, b3 = params
    h = x.reshape(x.shape[0], -1).astype(compute_dtype)
    h = jnp.dot(h, w1.astype(compute_dtype), preferred_element_type=jnp.float32) + b1
    h = jnp.maximum(h, 0.0).astype(compute_dtype)
    h = jnp.dot(h, w2.astype(compute_dtype), preferred_element_type=jnp.float32) + b2
    h = jnp.maximum(h, 0.0).astype(compute_dtype)
    return jnp.dot(h, w3.astype(compute_dtype), preferred_element_type=jnp.float32) + b3


if __name__ == "__main__":
    key = jax.random.PRNGKey(0)
    k_x, k_p = jax.random.split(key)

    # Small shapes consistent with the module: from_shape = (C, H, W) = (4, 16, 16),
    # latent_size = 8, batch = 2.
    B, C, H, W = 2, 4, 16, 16
    latent_size = 8
    in_features = C * H * W  # np.prod(from_shape) = 1024

    x = jax.random.normal(k_x, (B, C, H, W), dtype=jnp.float32)
    params = init_params(k_p, in_features, latent_size)

    out = decoder_forward(x, params)
    out = jax.block_until_ready(out)
    assert out.shape == (B, latent_size), out.shape

    # Tight check against a reference that mirrors the kernel's bf16/f32 math.
    ref_bf16 = reference_forward(x, params, compute_dtype=jnp.bfloat16)
    assert jnp.allclose(out, ref_bf16, atol=2e-3, rtol=2e-3), \
        float(jnp.max(jnp.abs(out - ref_bf16)))

    # Looser sanity check against the full-f32 PyTorch-equivalent forward.
    ref_f32 = reference_forward(x, params, compute_dtype=jnp.float32)
    assert jnp.allclose(out, ref_f32, atol=5e-2, rtol=5e-2), \
        float(jnp.max(jnp.abs(out - ref_f32)))

    print("KERNEL_OK")
</pallas_src>

<mosaic_0001>
module attributes {stable_mosaic.version = 11 : i64} {
  func.func @decoder_kernel(%arg0: i32, %arg1: memref<2x1024xf32, #tpu.memory_space<vmem>>, %arg2: memref<1024x32xbf16, #tpu.memory_space<vmem>>, %arg3: memref<1x32xf32, #tpu.memory_space<vmem>>, %arg4: memref<32x32xbf16, #tpu.memory_space<vmem>>, %arg5: memref<1x32xf32, #tpu.memory_space<vmem>>, %arg6: memref<32x8xbf16, #tpu.memory_space<vmem>>, %arg7: memref<1x8xf32, #tpu.memory_space<vmem>>, %arg8: memref<2x8xf32, #tpu.memory_space<vmem>>) attributes {dimension_semantics = [#tpu.dimension_semantics<parallel>], iteration_bounds = array<i64: 1>, scalar_prefetch = 0 : i64, scratch_operands = 0 : i64, tpu.core_type = #tpu.core_type<tc>, window_params = [{transform_indices = @transform_0, window_bounds = array<i64: 2, 1024>}, {pipeline_mode = #tpu.pipeline_mode<synchronous>, transform_indices = @transform_1, window_bounds = array<i64: 1024, 32>}, {pipeline_mode = #tpu.pipeline_mode<synchronous>, transform_indices = @transform_2, window_bounds = array<i64: 1, 32>}, {pipeline_mode = #tpu.pipeline_mode<synchronous>, transform_indices = @transform_3, window_bounds = array<i64: 32, 32>}, {pipeline_mode = #tpu.pipeline_mode<synchronous>, transform_indices = @transform_4, window_bounds = array<i64: 1, 32>}, {pipeline_mode = #tpu.pipeline_mode<synchronous>, transform_indices = @transform_5, window_bounds = array<i64: 32, 8>}, {pipeline_mode = #tpu.pipeline_mode<synchronous>, transform_indices = @transform_6, window_bounds = array<i64: 1, 8>}, {transform_indices = @transform_7, window_bounds = array<i64: 2, 8>}]} {
    %c0 = arith.constant 0 : index
    %c0_0 = arith.constant 0 : index
    %0 = vector.load %arg1[%c0, %c0_0] : memref<2x1024xf32, #tpu.memory_space<vmem>>, vector<2x1024xf32>
    %1 = arith.truncf %0 : vector<2x1024xf32> to vector<2x1024xbf16>
    %c0_1 = arith.constant 0 : index
    %c0_2 = arith.constant 0 : index
    %2 = vector.load %arg2[%c0_1, %c0_2] : memref<1024x32xbf16, #tpu.memory_space<vmem>>, vector<1024x32xbf16>
    %cst = arith.constant dense<0.000000e+00> : vector<2x32xf32>
    %3 = tpu.matmul %1, %2, %cst {dimension_numbers = #tpu.dot_dimension_numbers<[1], [0], [0], [1], [0, 0, 1, 1], [], []>} : vector<2x1024xbf16>, vector<1024x32xbf16>, vector<2x32xf32> -> vector<2x32xf32>
    %c0_3 = arith.constant 0 : index
    %c0_4 = arith.constant 0 : index
    %4 = vector.load %arg3[%c0_3, %c0_4] : memref<1x32xf32, #tpu.memory_space<vmem>>, vector<1x32xf32>
    %5 = vector.broadcast %4 : vector<1x32xf32> to vector<2x32xf32>
    %6 = arith.addf %3, %5 : vector<2x32xf32>
    %cst_5 = arith.constant 0.000000e+00 : f32
    %7 = vector.broadcast %cst_5 : f32 to vector<2x32xf32>
    %8 = arith.maximumf %6, %7 : vector<2x32xf32>
    %9 = arith.truncf %8 : vector<2x32xf32> to vector<2x32xbf16>
    %c0_6 = arith.constant 0 : index
    %c0_7 = arith.constant 0 : index
    %10 = vector.load %arg4[%c0_6, %c0_7] : memref<32x32xbf16, #tpu.memory_space<vmem>>, vector<32x32xbf16>
    %cst_8 = arith.constant dense<0.000000e+00> : vector<2x32xf32>
    %11 = tpu.matmul %9, %10, %cst_8 {dimension_numbers = #tpu.dot_dimension_numbers<[1], [0], [0], [1], [0, 0, 1, 1], [], []>} : vector<2x32xbf16>, vector<32x32xbf16>, vector<2x32xf32> -> vector<2x32xf32>
    %c0_9 = arith.constant 0 : index
    %c0_10 = arith.constant 0 : index
    %12 = vector.load %arg5[%c0_9, %c0_10] : memref<1x32xf32, #tpu.memory_space<vmem>>, vector<1x32xf32>
    %13 = vector.broadcast %12 : vector<1x32xf32> to vector<2x32xf32>
    %14 = arith.addf %11, %13 : vector<2x32xf32>
    %cst_11 = arith.constant 0.000000e+00 : f32
    %15 = vector.broadcast %cst_11 : f32 to vector<2x32xf32>
    %16 = arith.maximumf %14, %15 : vector<2x32xf32>
    %17 = arith.truncf %16 : vector<2x32xf32> to vector<2x32xbf16>
    %c0_12 = arith.constant 0 : index
    %c0_13 = arith.constant 0 : index
    %18 = vector.load %arg6[%c0_12, %c0_13] : memref<32x8xbf16, #tpu.memory_space<vmem>>, vector<32x8xbf16>
    %cst_14 = arith.constant dense<0.000000e+00> : vector<2x8xf32>
    %19 = tpu.matmul %17, %18, %cst_14 {dimension_numbers = #tpu.dot_dimension_numbers<[1], [0], [0], [1], [0, 0, 1, 1], [], []>} : vector<2x32xbf16>, vector<32x8xbf16>, vector<2x8xf32> -> vector<2x8xf32>
    %c0_15 = arith.constant 0 : index
    %c0_16 = arith.constant 0 : index
    %20 = vector.load %arg7[%c0_15, %c0_16] : memref<1x8xf32, #tpu.memory_space<vmem>>, vector<1x8xf32>
    %21 = vector.broadcast %20 : vector<1x8xf32> to vector<2x8xf32>
    %22 = arith.addf %19, %21 : vector<2x8xf32>
    %c0_17 = arith.constant 0 : index
    %c0_18 = arith.constant 0 : index
    %23 = vector.load %arg8[%c0_17, %c0_18] : memref<2x8xf32, #tpu.memory_space<vmem>>, vector<2x8xf32>
    tpu.vector_store %arg8[%c0_17, %c0_18], %22 {strides = array<i32>} : memref<2x8xf32, #tpu.memory_space<vmem>>, vector<2x8xf32>,
    return
  }
  func.func @transform_0(%arg0: i32) -> (i32, i32) {
    %c0_i32 = arith.constant 0 : i32
    %c0_i32_0 = arith.constant 0 : i32
    return %arg0, %c0_i32 : i32, i32
  }
  func.func @transform_1(%arg0: i32) -> (i32, i32) {
    %c0_i32 = arith.constant 0 : i32
    %c0_i32_0 = arith.constant 0 : i32
    %c0_i32_1 = arith.constant 0 : i32
    return %c0_i32, %c0_i32_0 : i32, i32
  }
  func.func @transform_2(%arg0: i32) -> (i32, i32) {
    %c0_i32 = arith.constant 0 : i32
    %c0_i32_0 = arith.constant 0 : i32
    %c0_i32_1 = arith.constant 0 : i32
    return %c0_i32, %c0_i32_0 : i32, i32
  }
  func.func @transform_3(%arg0: i32) -> (i32, i32) {
    %c0_i32 = arith.constant 0 : i32
    %c0_i32_0 = arith.constant 0 : i32
    %c0_i32_1 = arith.constant 0 : i32
    return %c0_i32, %c0_i32_0 : i32, i32
  }
  func.func @transform_4(%arg0: i32) -> (i32, i32) {
    %c0_i32 = arith.constant 0 : i32
    %c0_i32_0 = arith.constant 0 : i32
    %c0_i32_1 = arith.constant 0 : i32
    return %c0_i32, %c0_i32_0 : i32, i32
  }
  func.func @transform_5(%arg0: i32) -> (i32, i32) {
    %c0_i32 = arith.constant 0 : i32
    %c0_i32_0 = arith.constant 0 : i32
    %c0_i32_1 = arith.constant 0 : i32
    return %c0_i32, %c0_i32_0 : i32, i32
  }
  func.func @transform_6(%arg0: i32) -> (i32, i32) {
    %c0_i32 = arith.constant 0 : i32
    %c0_i32_0 = arith.constant 0 : i32
    %c0_i32_1 = arith.constant 0 : i32
    return %c0_i32, %c0_i32_0 : i32, i32
  }
  func.func @transform_7(%arg0: i32) -> (i32, i32) {
    %c0_i32 = arith.constant 0 : i32
    %c0_i32_0 = arith.constant 0 : i32
    return %arg0, %c0_i32 : i32, i32
  }
}

</mosaic_0001>

<llo_original>
// kernel: tpu_custom_call.1
$region0: #{tpu_custom_call.1}
  #allocation0 [shape = 'u32[]', space=smem, size = 0x4, offset = 0x4, fixed_abs, tag = 'smem constant byte address 0x4 - core index']
  #allocation1 [shape = 'u32[72,128]{1,0:T(1,128)}', space=vmem, size = 0x9000, scoped, tag = 'internal scratch']
  %s0 = inlined_call_operand.vmem [shape: f32[2,1024], index: 0, kind: input, shape index: {}]
  %s1 = inlined_call_operand.vmem [shape: bf16[1024,32], index: 1, kind: input, shape index: {}]
  %s2 = inlined_call_operand.vmem [shape: f32[1,32], index: 2, kind: input, shape index: {}]
  %s3 = inlined_call_operand.vmem [shape: bf16[32,32], index: 3, kind: input, shape index: {}]
  %s4 = inlined_call_operand.vmem [shape: f32[1,32], index: 4, kind: input, shape index: {}]
  %s5 = inlined_call_operand.vmem [shape: bf16[32,8], index: 5, kind: input, shape index: {}]
  %s6 = inlined_call_operand.vmem [shape: f32[1,8], index: 6, kind: input, shape index: {}]
  %s7 = inlined_call_operand.hbm [shape: f32[2,8], index: 7, kind: output, shape index: {}]
  %s8 = sld [smem:[#allocation0]]
  $region38: #{tpu_custom_call.1} parent=0
    _
  %s10 = ssub.s32 1, %s8
  %s11 = scalar_select 0, %s10, %s8
  $region1: #{tpu_custom_call.1} parent=0
    #allocation2 [shape = 'u8[1024]{0}', space=vmem, size = 0x400, scoped, tag = 'output window, operand 0, single buffered']
    #allocation3 [shape = 's32[1]{0}', space=sflag, size = 0x4, scoped, tag = 'scoped memory for tpu_custom_call.1']
    %12 = vsyncpa [#allocation3], 0
    // Predicated region
    $region2: #{tpu_custom_call.1} parent=1 // pred_check
      _
    $region3: #{tpu_custom_call.1} parent=1 // pred_check_branch
      %14 = sbr.rel (0) target = $region5
    $region4: #{tpu_custom_call.1} parent=1 // pred_region
      _
    $region5: #{tpu_custom_call.1} parent=1 // pred_fallthru
      _
    // Predicated region
    $region6: #{tpu_custom_call.1} parent=1 // pred_check
      _
    $region7: #{tpu_custom_call.1} parent=1 // pred_check_branch
      %16 = sbr.rel (0) target = $region9
    $region8: #{tpu_custom_call.1} parent=1 // pred_region
      _
    $region9: #{tpu_custom_call.1} parent=1 // pred_fallthru
      _
    // Predicated region
    $region10: #{tpu_custom_call.1} parent=1 // pred_check
      _
    $region11: #{tpu_custom_call.1} parent=1 // pred_check_branch
      %18 = sbr.rel (0) target = $region13
    $region12: #{tpu_custom_call.1} parent=1 // pred_region
      _
    $region13: #{tpu_custom_call.1} parent=1 // pred_fallthru
      _
    // Predicated region
    $region14: #{tpu_custom_call.1} parent=1 // pred_check
      _
    $region15: #{tpu_custom_call.1} parent=1 // pred_check_branch
      %20 = sbr.rel (0) target = $region17
    $region16: #{tpu_custom_call.1} parent=1 // pred_region
      _
    $region17: #{tpu_custom_call.1} parent=1 // pred_fallthru
      _
    // Predicated region
    $region18: #{tpu_custom_call.1} parent=1 // pred_check
      _
    $region19: #{tpu_custom_call.1} parent=1 // pred_check_branch
      %22 = sbr.rel (0) target = $region21
    $region20: #{tpu_custom_call.1} parent=1 // pred_region
      _
    $region21: #{tpu_custom_call.1} parent=1 // pred_fallthru
      _
    // Predicated region
    $region22: #{tpu_custom_call.1} parent=1 // pred_check
      _
    $region23: #{tpu_custom_call.1} parent=1 // pred_check_branch
      %24 = sbr.rel (0) target = $region25
    $region24: #{tpu_custom_call.1} parent=1 // pred_region
      _
    $region25: #{tpu_custom_call.1} parent=1 // pred_fallthru
      _
    // Predicated region
    $region26: #{tpu_custom_call.1} parent=1 // pred_check
      _
    $region27: #{tpu_custom_call.1} parent=1 // pred_check_branch
      %26 = sbr.rel (0) target = $region29
    $region28: #{tpu_custom_call.1} parent=1 // pred_region
      _
    $region29: #{tpu_custom_call.1} parent=1 // pred_fallthru
      _
    %v28 = vld [vmem:[%s0] sm:$0xff]
    %v29 = vld [vmem:[%s0 + $0x8] sm:$0xff]
    %32 = vst [vmem:[#allocation1] ss:$4 sm:$0xff] %v28
    %s33 = scalar_lea.vmem [#allocation1], 32
    %34 = vst [vmem:[%s33] ss:$4 sm:$0xff] %v29
    %v35 = vld.sshfl [vmem:[#allocation1] sm:$0xff pattern:$0x73625140]
    %v36 = vld.sshfl [vmem:[#allocation1 + $0x8] sm:$0xff pattern:$0x73625140]
    %v37 = vld.sshfl [vmem:[#allocation1 + $0x10] sm:$0xff pattern:$0x73625140]
    %v38 = vld.sshfl [vmem:[#allocation1 + $0x18] sm:$0xff pattern:$0x73625140]
    %v39 = vld.sshfl [vmem:[#allocation1 + $0x20] sm:$0xff pattern:$0x73625140]
    %v40 = vld.sshfl [vmem:[#allocation1 + $0x28] sm:$0xff pattern:$0x73625140]
    %v41 = vld.sshfl [vmem:[#allocation1 + $0x30] sm:$0xff pattern:$0x73625140]
    %v42 = vld.sshfl [vmem:[#allocation1 + $0x38] sm:$0xff pattern:$0x73625140]
    %v51 = vpack.c.bf16 %v35, %v35
    %v52 = vpack.c.bf16 %v36, %v36
    %v53 = vpack.c.bf16 %v37, %v37
    %v54 = vpack.c.bf16 %v38, %v38
    %v55 = vpack.c.bf16 %v39, %v39
    %v56 = vpack.c.bf16 %v40, %v40
    %v57 = vpack.c.bf16 %v41, %v41
    %v58 = vpack.c.bf16 %v42, %v42
    %v59 = vld [vmem:[%s1] sm:$0xf]
    %v60 = vld [vmem:[%s1 + $0x4] sm:$0xf]
    %v61 = vld [vmem:[%s1 + $0x8] sm:$0xf]
    %v62 = vld [vmem:[%s1 + $0xc] sm:$0xf]
    %v63 = vld [vmem:[%s1 + $0x10] sm:$0xf]
    %v64 = vld [vmem:[%s1 + $0x14] sm:$0xf]
    %v65 = vld [vmem:[%s1 + $0x18] sm:$0xf]
    %v66 = vld [vmem:[%s1 + $0x1c] sm:$0xf]
    %v67 = vld [vmem:[%s1 + $0x20] sm:$0xf]
    %v68 = vld [vmem:[%s1 + $0x24] sm:$0xf]
    %v69 = vld [vmem:[%s1 + $0x28] sm:$0xf]
    %v70 = vld [vmem:[%s1 + $0x2c] sm:$0xf]
    %v71 = vld [vmem:[%s1 + $0x30] sm:$0xf]
    %v72 = vld [vmem:[%s1 + $0x34] sm:$0xf]
    %v73 = vld [vmem:[%s1 + $0x38] sm:$0xf]
    %v74 = vld [vmem:[%s1 + $0x3c] sm:$0xf]
    %v75 = vld [vmem:[%s1 + $0x40] sm:$0xf]
    %v76 = vld [vmem:[%s1 + $0x44] sm:$0xf]
    %v77 = vld [vmem:[%s1 + $0x48] sm:$0xf]
    %v78 = vld [vmem:[%s1 + $0x4c] sm:$0xf]
    %v79 = vld [vmem:[%s1 + $0x50] sm:$0xf]
    %v80 = vld [vmem:[%s1 + $0x54] sm:$0xf]
    %v81 = vld [vmem:[%s1 + $0x58] sm:$0xf]
    %v82 = vld [vmem:[%s1 + $0x5c] sm:$0xf]
    %v83 = vld [vmem:[%s1 + $0x60] sm:$0xf]
    %v84 = vld [vmem:[%s1 + $0x64] sm:$0xf]
    %v85 = vld [vmem:[%s1 + $0x68] sm:$0xf]
    %v86 = vld [vmem:[%s1 + $0x6c] sm:$0xf]
    %v87 = vld [vmem:[%s1 + $0x70] sm:$0xf]
    %v88 = vld [vmem:[%s1 + $0x74] sm:$0xf]
    %v89 = vld [vmem:[%s1 + $0x78] sm:$0xf]
    %v90 = vld [vmem:[%s1 + $0x7c] sm:$0xf]
    %v91 = vld [vmem:[%s1 + $0x80] sm:$0xf]
    %v92 = vld [vmem:[%s1 + $0x84] sm:$0xf]
    %v93 = vld [vmem:[%s1 + $0x88] sm:$0xf]
    %v94 = vld [vmem:[%s1 + $0x8c] sm:$0xf]
    %v95 = vld [vmem:[%s1 + $0x90] sm:$0xf]
    %v96 = vld [vmem:[%s1 + $0x94] sm:$0xf]
    %v97 = vld [vmem:[%s1 + $0x98] sm:$0xf]
    %v98 = vld [vmem:[%s1 + $0x9c] sm:$0xf]
    %v99 = vld [vmem:[%s1 + $0xa0] sm:$0xf]
    %v100 = vld [vmem:[%s1 + $0xa4] sm:$0xf]
    %v101 = vld [vmem:[%s1 + $0xa8] sm:$0xf]
    %v102 = vld [vmem:[%s1 + $0xac] sm:$0xf]
    %v103 = vld [vmem:[%s1 + $0xb0] sm:$0xf]
    %v104 = vld [vmem:[%s1 + $0xb4] sm:$0xf]
    %v105 = vld [vmem:[%s1 + $0xb8] sm:$0xf]
    %v106 = vld [vmem:[%s1 + $0xbc] sm:$0xf]
    %v107 = vld [vmem:[%s1 + $0xc0] sm:$0xf]
    %v108 = vld [vmem:[%s1 + $0xc4] sm:$0xf]
    %v109 = vld [vmem:[%s1 + $0xc8] sm:$0xf]
    %v110 = vld [vmem:[%s1 + $0xcc] sm:$0xf]
    %v111 = vld [vmem:[%s1 + $0xd0] sm:$0xf]
    %v112 = vld [vmem:[%s1 + $0xd4] sm:$0xf]
    %v113 = vld [vmem:[%s1 + $0xd8] sm:$0xf]
    %v114 = vld [vmem:[%s1 + $0xdc] sm:$0xf]
    %v115 = vld [vmem:[%s1 + $0xe0] sm:$0xf]
    %v116 = vld [vmem:[%s1 + $0xe4] sm:$0xf]
    %v117 = vld [vmem:[%s1 + $0xe8] sm:$0xf]
    %v118 = vld [vmem:[%s1 + $0xec] sm:$0xf]
    %v119 = vld [vmem:[%s1 + $0xf0] sm:$0xf]
    %v120 = vld [vmem:[%s1 + $0xf4] sm:$0xf]
    %v121 = vld [vmem:[%s1 + $0xf8] sm:$0xf]
    %v122 = vld [vmem:[%s1 + $0xfc] sm:$0xf]
    %v123 = vld [vmem:[%s1 + $0x100] sm:$0xf]
    %v124 = vld [vmem:[%s1 + $0x104] sm:$0xf]
    %v125 = vld [vmem:[%s1 + $0x108] sm:$0xf]
    %v126 = vld [vmem:[%s1 + $0x10c] sm:$0xf]
    %v127 = vld [vmem:[%s1 + $0x110] sm:$0xf]
    %v128 = vld [vmem:[%s1 + $0x114] sm:$0xf]
    %v129 = vld [vmem:[%s1 + $0x118] sm:$0xf]
    %v130 = vld [vmem:[%s1 + $0x11c] sm:$0xf]
    %v131 = vld [vmem:[%s1 + $0x120] sm:$0xf]
    %v132 = vld [vmem:[%s1 + $0x124] sm:$0xf]
    %v133 = vld [vmem:[%s1 + $0x128] sm:$0xf]
    %v134 = vld [vmem:[%s1 + $0x12c] sm:$0xf]
    %v135 = vld [vmem:[%s1 + $0x130] sm:$0xf]
    %v136 = vld [vmem:[%s1 + $0x134] sm:$0xf]
    %v137 = vld [vmem:[%s1 + $0x138] sm:$0xf]
    %v138 = vld [vmem:[%s1 + $0x13c] sm:$0xf]
    %v139 = vld [vmem:[%s1 + $0x140] sm:$0xf]
    %v140 = vld [vmem:[%s1 + $0x144] sm:$0xf]
    %v141 = vld [vmem:[%s1 + $0x148] sm:$0xf]
    %v142 = vld [vmem:[%s1 + $0x14c] sm:$0xf]
    %v143 = vld [vmem:[%s1 + $0x150] sm:$0xf]
    %v144 = vld [vmem:[%s1 + $0x154] sm:$0xf]
    %v145 = vld [vmem:[%s1 + $0x158] sm:$0xf]
    %v146 = vld [vmem:[%s1 + $0x15c] sm:$0xf]
    %v147 = vld [vmem:[%s1 + $0x160] sm:$0xf]
    %v148 = vld [vmem:[%s1 + $0x164] sm:$0xf]
    %v149 = vld [vmem:[%s1 + $0x168] sm:$0xf]
    %v150 = vld [vmem:[%s1 + $0x16c] sm:$0xf]
    %v151 = vld [vmem:[%s1 + $0x170] sm:$0xf]
    %v152 = vld [vmem:[%s1 + $0x174] sm:$0xf]
    %v153 = vld [vmem:[%s1 + $0x178] sm:$0xf]
    %v154 = vld [vmem:[%s1 + $0x17c] sm:$0xf]
    %v155 = vld [vmem:[%s1 + $0x180] sm:$0xf]
    %v156 = vld [vmem:[%s1 + $0x184] sm:$0xf]
    %v157 = vld [vmem:[%s1 + $0x188] sm:$0xf]
    %v158 = vld [vmem:[%s1 + $0x18c] sm:$0xf]
    %v159 = vld [vmem:[%s1 + $0x190] sm:$0xf]
    %v160 = vld [vmem:[%s1 + $0x194] sm:$0xf]
    %v161 = vld [vmem:[%s1 + $0x198] sm:$0xf]
    %v162 = vld [vmem:[%s1 + $0x19c] sm:$0xf]
    %v163 = vld [vmem:[%s1 + $0x1a0] sm:$0xf]
    %v164 = vld [vmem:[%s1 + $0x1a4] sm:$0xf]
    %v165 = vld [vmem:[%s1 + $0x1a8] sm:$0xf]
    %v166 = vld [vmem:[%s1 + $0x1ac] sm:$0xf]
    %v167 = vld [vmem:[%s1 + $0x1b0] sm:$0xf]
    %v168 = vld [vmem:[%s1 + $0x1b4] sm:$0xf]
    %v169 = vld [vmem:[%s1 + $0x1b8] sm:$0xf]
    %v170 = vld [vmem:[%s1 + $0x1bc] sm:$0xf]
    %v171 = vld [vmem:[%s1 + $0x1c0] sm:$0xf]
    %v172 = vld [vmem:[%s1 + $0x1c4] sm:$0xf]
    %v173 = vld [vmem:[%s1 + $0x1c8] sm:$0xf]
    %v174 = vld [vmem:[%s1 + $0x1cc] sm:$0xf]
    %v175 = vld [vmem:[%s1 + $0x1d0] sm:$0xf]
    %v176 = vld [vmem:[%s1 + $0x1d4] sm:$0xf]
    %v177 = vld [vmem:[%s1 + $0x1d8] sm:$0xf]
    %v178 = vld [vmem:[%s1 + $0x1dc] sm:$0xf]
    %v179 = vld [vmem:[%s1 + $0x1e0] sm:$0xf]
    %v180 = vld [vmem:[%s1 + $0x1e4] sm:$0xf]
    %v181 = vld [vmem:[%s1 + $0x1e8] sm:$0xf]
    %v182 = vld [vmem:[%s1 + $0x1ec] sm:$0xf]
    %v183 = vld [vmem:[%s1 + $0x1f0] sm:$0xf]
    %v184 = vld [vmem:[%s1 + $0x1f4] sm:$0xf]
    %v185 = vld [vmem:[%s1 + $0x1f8] sm:$0xf]
    %v186 = vld [vmem:[%s1 + $0x1fc] sm:$0xf]
    %v187 = vld [vmem:[%s2] sm:$0x1]
    %v189 = vperm.slane %v187, 0
    %v319 = vunpack.c.l.b16 %v59
    %v320 = vunpack.c.l.b16 %v60
    %v321 = vunpack.c.l.b16 %v61
    %v322 = vunpack.c.l.b16 %v62
    %v323 = vunpack.c.l.b16 %v63
    %v324 = vunpack.c.l.b16 %v64
    %v325 = vunpack.c.l.b16 %v65
    %v326 = vunpack.c.l.b16 %v66
    %v327 = vunpack.c.l.b16 %v67
    %v328 = vunpack.c.l.b16 %v68
    %v329 = vunpack.c.l.b16 %v69
    %v330 = vunpack.c.l.b16 %v70
    %v331 = vunpack.c.l.b16 %v71
    %v332 = vunpack.c.l.b16 %v72
    %v333 = vunpack.c.l.b16 %v73
    %v334 = vunpack.c.l.b16 %v74
    %v335 = vunpack.c.l.b16 %v75
    %v336 = vunpack.c.l.b16 %v76
    %v337 = vunpack.c.l.b16 %v77
    %v338 = vunpack.c.l.b16 %v78
    %v339 = vunpack.c.l.b16 %v79
    %v340 = vunpack.c.l.b16 %v80
    %v341 = vunpack.c.l.b16 %v81
    %v342 = vunpack.c.l.b16 %v82
    %v343 = vunpack.c.l.b16 %v83
    %v344 = vunpack.c.l.b16 %v84
    %v345 = vunpack.c.l.b16 %v85
    %v346 = vunpack.c.l.b16 %v86
    %v347 = vunpack.c.l.b16 %v87
    %v348 = vunpack.c.l.b16 %v88
    %v349 = vunpack.c.l.b16 %v89
    %v350 = vunpack.c.l.b16 %v90
    %v351 = vunpack.c.l.b16 %v91
    %v352 = vunpack.c.l.b16 %v92
    %v353 = vunpack.c.l.b16 %v93
    %v354 = vunpack.c.l.b16 %v94
    %v355 = vunpack.c.l.b16 %v95
    %v356 = vunpack.c.l.b16 %v96
    %v357 = vunpack.c.l.b16 %v97
    %v358 = vunpack.c.l.b16 %v98
    %v359 = vunpack.c.l.b16 %v99
    %v360 = vunpack.c.l.b16 %v100
    %v361 = vunpack.c.l.b16 %v101
    %v362 = vunpack.c.l.b16 %v102
    %v363 = vunpack.c.l.b16 %v103
    %v364 = vunpack.c.l.b16 %v104
    %v365 = vunpack.c.l.b16 %v105
    %v366 = vunpack.c.l.b16 %v106
    %v367 = vunpack.c.l.b16 %v107
    %v368 = vunpack.c.l.b16 %v108
    %v369 = vunpack.c.l.b16 %v109
    %v370 = vunpack.c.l.b16 %v110
    %v371 = vunpack.c.l.b16 %v111
    %v372 = vunpack.c.l.b16 %v112
    %v373 = vunpack.c.l.b16 %v113
    %v374 = vunpack.c.l.b16 %v114
    %v375 = vunpack.c.l.b16 %v115
    %v376 = vunpack.c.l.b16 %v116
    %v377 = vunpack.c.l.b16 %v117
    %v378 = vunpack.c.l.b16 %v118
    %v379 = vunpack.c.l.b16 %v119
    %v380 = vunpack.c.l.b16 %v120
    %v381 = vunpack.c.l.b16 %v121
    %v382 = vunpack.c.l.b16 %v122
    %v383 = vunpack.c.l.b16 %v123
    %v384 = vunpack.c.l.b16 %v124
    %v385 = vunpack.c.l.b16 %v125
    %v386 = vunpack.c.l.b16 %v126
    %v387 = vunpack.c.l.b16 %v127
    %v388 = vunpack.c.l.b16 %v128
    %v389 = vunpack.c.l.b16 %v129
    %v390 = vunpack.c.l.b16 %v130
    %v391 = vunpack.c.l.b16 %v131
    %v392 = vunpack.c.l.b16 %v132
    %v393 = vunpack.c.l.b16 %v133
    %v394 = vunpack.c.l.b16 %v134
    %v395 = vunpack.c.l.b16 %v135
    %v396 = vunpack.c.l.b16 %v136
    %v397 = vunpack.c.l.b16 %v137
    %v398 = vunpack.c.l.b16 %v138
    %v399 = vunpack.c.l.b16 %v139
    %v400 = vunpack.c.l.b16 %v140
    %v401 = vunpack.c.l.b16 %v141
    %v402 = vunpack.c.l.b16 %v142
    %v403 = vunpack.c.l.b16 %v143
    %v404 = vunpack.c.l.b16 %v144
    %v405 = vunpack.c.l.b16 %v145
    %v406 = vunpack.c.l.b16 %v146
    %v407 = vunpack.c.l.b16 %v147
    %v408 = vunpack.c.l.b16 %v148
    %v409 = vunpack.c.l.b16 %v149
    %v410 = vunpack.c.l.b16 %v150
    %v411 = vunpack.c.l.b16 %v151
    %v412 = vunpack.c.l.b16 %v152
    %v413 = vunpack.c.l.b16 %v153
    %v414 = vunpack.c.l.b16 %v154
    %v415 = vunpack.c.l.b16 %v155
    %v416 = vunpack.c.l.b16 %v156
    %v417 = vunpack.c.l.b16 %v157
    %v418 = vunpack.c.l.b16 %v158
    %v419 = vunpack.c.l.b16 %v159
    %v420 = vunpack.c.l.b16 %v160
    %v421 = vunpack.c.l.b16 %v161
    %v422 = vunpack.c.l.b16 %v162
    %v423 = vunpack.c.l.b16 %v163
    %v424 = vunpack.c.l.b16 %v164
    %v425 = vunpack.c.l.b16 %v165
    %v426 = vunpack.c.l.b16 %v166
    %v427 = vunpack.c.l.b16 %v167
    %v428 = vunpack.c.l.b16 %v168
    %v429 = vunpack.c.l.b16 %v169
    %v430 = vunpack.c.l.b16 %v170
    %v431 = vunpack.c.l.b16 %v171
    %v432 = vunpack.c.l.b16 %v172
    %v433 = vunpack.c.l.b16 %v173
    %v434 = vunpack.c.l.b16 %v174
    %v435 = vunpack.c.l.b16 %v175
    %v436 = vunpack.c.l.b16 %v176
    %v437 = vunpack.c.l.b16 %v177
    %v438 = vunpack.c.l.b16 %v178
    %v439 = vunpack.c.l.b16 %v179
    %v440 = vunpack.c.l.b16 %v180
    %v441 = vunpack.c.l.b16 %v181
    %v442 = vunpack.c.l.b16 %v182
    %v443 = vunpack.c.l.b16 %v183
    %v444 = vunpack.c.l.b16 %v184
    %v445 = vunpack.c.l.b16 %v185
    %v446 = vunpack.c.l.b16 %v186
    %v447 = vpack.c.b16 %v320, %v319
    %v448 = vpack.c.b16 %v322, %v321
    %v449 = vpack.c.b16 %v324, %v323
    %v450 = vpack.c.b16 %v326, %v325
    %v451 = vpack.c.b16 %v328, %v327
    %v452 = vpack.c.b16 %v330, %v329
    %v453 = vpack.c.b16 %v332, %v331
    %v454 = vpack.c.b16 %v334, %v333
    %v455 = vpack.c.b16 %v336, %v335
    %v456 = vpack.c.b16 %v338, %v337
    %v457 = vpack.c.b16 %v340, %v339
    %v458 = vpack.c.b16 %v342, %v341
    %v459 = vpack.c.b16 %v344, %v343
    %v460 = vpack.c.b16 %v346, %v345
    %v461 = vpack.c.b16 %v348, %v347
    %v462 = vpack.c.b16 %v350, %v349
    %v463 = vpack.c.b16 %v352, %v351
    %v464 = vpack.c.b16 %v354, %v353
    %v465 = vpack.c.b16 %v356, %v355
    %v466 = vpack.c.b16 %v358, %v357
    %v467 = vpack.c.b16 %v360, %v359
    %v468 = vpack.c.b16 %v362, %v361
    %v469 = vpack.c.b16 %v364, %v363
    %v470 = vpack.c.b16 %v366, %v365
    %v471 = vpack.c.b16 %v368, %v367
    %v472 = vpack.c.b16 %v370, %v369
    %v473 = vpack.c.b16 %v372, %v371
    %v474 = vpack.c.b16 %v374, %v373
    %v475 = vpack.c.b16 %v376, %v375
    %v476 = vpack.c.b16 %v378, %v377
    %v477 = vpack.c.b16 %v380, %v379
    %v478 = vpack.c.b16 %v382, %v381
    %v479 = vpack.c.b16 %v384, %v383
    %v480 = vpack.c.b16 %v386, %v385
    %v481 = vpack.c.b16 %v388, %v387
    %v482 = vpack.c.b16 %v390, %v389
    %v483 = vpack.c.b16 %v392, %v391
    %v484 = vpack.c.b16 %v394, %v393
    %v485 = vpack.c.b16 %v396, %v395
    %v486 = vpack.c.b16 %v398, %v397
    %v487 = vpack.c.b16 %v400, %v399
    %v488 = vpack.c.b16 %v402, %v401
    %v489 = vpack.c.b16 %v404, %v403
    %v490 = vpack.c.b16 %v406, %v405
    %v491 = vpack.c.b16 %v408, %v407
    %v492 = vpack.c.b16 %v410, %v409
    %v493 = vpack.c.b16 %v412, %v411
    %v494 = vpack.c.b16 %v414, %v413
    %v495 = vpack.c.b16 %v416, %v415
    %v496 = vpack.c.b16 %v418, %v417
    %v497 = vpack.c.b16 %v420, %v419
    %v498 = vpack.c.b16 %v422, %v421
    %v499 = vpack.c.b16 %v424, %v423
    %v500 = vpack.c.b16 %v426, %v425
    %v501 = vpack.c.b16 %v428, %v427
    %v502 = vpack.c.b16 %v430, %v429
    %v503 = vpack.c.b16 %v432, %v431
    %v504 = vpack.c.b16 %v434, %v433
    %v505 = vpack.c.b16 %v436, %v435
    %v506 = vpack.c.b16 %v438, %v437
    %v507 = vpack.c.b16 %v440, %v439
    %v508 = vpack.c.b16 %v442, %v441
    %v509 = vpack.c.b16 %v444, %v443
    %v510 = vpack.c.b16 %v446, %v445
    %575 = vmatpush.bf16.msra.mxu0 %v454
    %576 = vmatpush.bf16.msra.mxu0 %v453
    %577 = vmatpush.bf16.msra.mxu0 %v452
    %578 = vmatpush.bf16.msra.mxu0 %v451
    %579 = vmatpush.bf16.msra.mxu0 %v450
    %580 = vmatpush.bf16.msra.mxu0 %v449
    %581 = vmatpush.bf16.msra.mxu0 %v448
    %582 = vmatpush.bf16.msra.mxu0 %v447
    %583 = vmatmul.bf16.gmra.mxu0 %v51
    %v584 = vpop.f32.mrf.mxu0
    %v585 = vadd.f32 %v189, %v584
    %v586 = vpop.f32.mrf.mxu0
    %587 = vdwg.mxu0
    %588 = vmatpush.bf16.msra.mxu0 %v462
    %589 = vmatpush.bf16.msra.mxu0 %v461
    %590 = vmatpush.bf16.msra.mxu0 %v460
    %591 = vmatpush.bf16.msra.mxu0 %v459
    %592 = vmatpush.bf16.msra.mxu0 %v458
    %593 = vmatpush.bf16.msra.mxu0 %v457
    %594 = vmatpush.bf16.msra.mxu0 %v456
    %595 = vmatpush.bf16.msra.mxu0 %v455
    %596 = vmatmul.bf16.gmra.mxu0 %v52
    %v597 = vpop.f32.mrf.mxu0
    %v598 = vadd.f32 %v585, %v597
    %v599 = vpop.f32.mrf.mxu0
    %600 = vdwg.mxu0
    %601 = vmatpush.bf16.msra.mxu0 %v470
    %602 = vmatpush.bf16.msra.mxu0 %v469
    %603 = vmatpush.bf16.msra.mxu0 %v468
    %604 = vmatpush.bf16.msra.mxu0 %v467
    %605 = vmatpush.bf16.msra.mxu0 %v466
    %606 = vmatpush.bf16.msra.mxu0 %v465
    %607 = vmatpush.bf16.msra.mxu0 %v464
    %608 = vmatpush.bf16.msra.mxu0 %v463
    %609 = vmatmul.bf16.gmra.mxu0 %v53
    %v610 = vpop.f32.mrf.mxu0
    %v611 = vadd.f32 %v598, %v610
    %v612 = vpop.f32.mrf.mxu0
    %613 = vdwg.mxu0
    %614 = vmatpush.bf16.msra.mxu0 %v478
    %615 = vmatpush.bf16.msra.mxu0 %v477
    %616 = vmatpush.bf16.msra.mxu0 %v476
    %617 = vmatpush.bf16.msra.mxu0 %v475
    %618 = vmatpush.bf16.msra.mxu0 %v474
    %619 = vmatpush.bf16.msra.mxu0 %v473
    %620 = vmatpush.bf16.msra.mxu0 %v472
    %621 = vmatpush.bf16.msra.mxu0 %v471
    %622 = vmatmul.bf16.gmra.mxu0 %v54
    %v623 = vpop.f32.mrf.mxu0
    %v624 = vadd.f32 %v611, %v623
    %v625 = vpop.f32.mrf.mxu0
    %626 = vdwg.mxu0
    %627 = vmatpush.bf16.msra.mxu0 %v486
    %628 = vmatpush.bf16.msra.mxu0 %v485
    %629 = vmatpush.bf16.msra.mxu0 %v484
    %630 = vmatpush.bf16.msra.mxu0 %v483
    %631 = vmatpush.bf16.msra.mxu0 %v482
    %632 = vmatpush.bf16.msra.mxu0 %v481
    %633 = vmatpush.bf16.msra.mxu0 %v480
    %634 = vmatpush.bf16.msra.mxu0 %v479
    %635 = vmatmul.bf16.gmra.mxu0 %v55
    %v636 = vpop.f32.mrf.mxu0
    %v637 = vadd.f32 %v624, %v636
    %v638 = vpop.f32.mrf.mxu0
    %639 = vdwg.mxu0
    %640 = vmatpush.bf16.msra.mxu0 %v494
    %641 = vmatpush.bf16.msra.mxu0 %v493
    %642 = vmatpush.bf16.msra.mxu0 %v492
    %643 = vmatpush.bf16.msra.mxu0 %v491
    %644 = vmatpush.bf16.msra.mxu0 %v490
    %645 = vmatpush.bf16.msra.mxu0 %v489
    %646 = vmatpush.bf16.msra.mxu0 %v488
    %647 = vmatpush.bf16.msra.mxu0 %v487
    %648 = vmatmul.bf16.gmra.mxu0 %v56
    %v649 = vpop.f32.mrf.mxu0
    %v650 = vadd.f32 %v637, %v649
    %v651 = vpop.f32.mrf.mxu0
    %652 = vdwg.mxu0
    %653 = vmatpush.bf16.msra.mxu0 %v502
    %654 = vmatpush.bf16.msra.mxu0 %v501
    %655 = vmatpush.bf16.msra.mxu0 %v500
    %656 = vmatpush.bf16.msra.mxu0 %v499
    %657 = vmatpush.bf16.msra.mxu0 %v498
    %658 = vmatpush.bf16.msra.mxu0 %v497
    %659 = vmatpush.bf16.msra.mxu0 %v496
    %660 = vmatpush.bf16.msra.mxu0 %v495
    %661 = vmatmul.bf16.gmra.mxu0 %v57
    %v662 = vpop.f32.mrf.mxu0
    %v663 = vadd.f32 %v650, %v662
    %v664 = vpop.f32.mrf.mxu0
    %665 = vdwg.mxu0
    %666 = vmatpush.bf16.msra.mxu0 %v510
    %667 = vmatpush.bf16.msra.mxu0 %v509
    %668 = vmatpush.bf16.msra.mxu0 %v508
    %669 = vmatpush.bf16.msra.mxu0 %v507
    %670 = vmatpush.bf16.msra.mxu0 %v506
    %671 = vmatpush.bf16.msra.mxu0 %v505
    %672 = vmatpush.bf16.msra.mxu0 %v504
    %673 = vmatpush.bf16.msra.mxu0 %v503
    %674 = vmatmul.bf16.gmra.mxu0 %v58
    %v675 = vpop.f32.mrf.mxu0
    %v676 = vadd.f32 %v663, %v675
    %v677 = vpop.f32.mrf.mxu0
    %678 = vdwg.mxu0
    %v679 = vmax.f32 %v676, 0.0
    %v680 = vpack.c.bf16 %v679, %v679
    %v681 = vld [vmem:[%s3] sm:$0xf]
    %v682 = vld [vmem:[%s3 + $0x4] sm:$0xf]
    %v683 = vld [vmem:[%s3 + $0x8] sm:$0xf]
    %v684 = vld [vmem:[%s3 + $0xc] sm:$0xf]
    %v685 = vld [vmem:[%s4] sm:$0x1]
    %v687 = vperm.slane %v685, 0
    %v693 = vunpack.c.l.b16 %v681
    %v694 = vunpack.c.l.b16 %v682
    %v695 = vunpack.c.l.b16 %v683
    %v696 = vunpack.c.l.b16 %v684
    %v697 = vpack.c.b16 %v694, %v693
    %v698 = vpack.c.b16 %v696, %v695
    %vm701 = vcmask 261120
    %v703 = vsel %vm701, %v680, 0
    %705 = vmatpush.bf16.msra.mxu0 0
    %706 = vmatpush.bf16.msra.mxu0 0
    %707 = vmatpush.bf16.msra.mxu0 0
    %708 = vmatpush.bf16.msra.mxu0 0
    %709 = vmatpush.bf16.msra.mxu0 0
    %710 = vmatpush.bf16.msra.mxu0 0
    %711 = vmatpush.bf16.msra.mxu0 %v698
    %712 = vmatpush.bf16.msra.mxu0 %v697
    %713 = vmatmul.bf16.gmra.mxu0 %v703
    %v714 = vpop.f32.mrf.mxu0
    %v715 = vadd.f32 %v687, %v714
    %v716 = vpop.f32.mrf.mxu0
    %717 = vdwg.mxu0
    %v718 = vmax.f32 %v715, 0.0
    %v719 = vpack.c.bf16 %v718, %v718
    %v720 = vld [vmem:[%s5] sm:$0xf]
    %v721 = vld [vmem:[%s5 + $0x4] sm:$0xf]
    %v722 = vld [vmem:[%s5 + $0x8] sm:$0xf]
    %v723 = vld [vmem:[%s5 + $0xc] sm:$0xf]
    %v724 = vld [vmem:[%s6] sm:$0x1]
    %v726 = vperm.slane %v724, 0
    %v732 = vunpack.c.l.b16 %v720
    %v733 = vunpack.c.l.b16 %v721
    %v734 = vunpack.c.l.b16 %v722
    %v735 = vunpack.c.l.b16 %v723
    %v736 = vpack.c.b16 %v733, %v732
    %v737 = vpack.c.b16 %v735, %v734
    %v741 = vsel %vm701, %v719, 0
    %743 = vmatpush.bf16.msra.mxu0 0
    %744 = vmatpush.bf16.msra.mxu0 0
    %745 = vmatpush.bf16.msra.mxu0 0
    %746 = vmatpush.bf16.msra.mxu0 0
    %747 = vmatpush.bf16.msra.mxu0 0
    %748 = vmatpush.bf16.msra.mxu0 0
    %749 = vmatpush.bf16.msra.mxu0 %v737
    %750 = vmatpush.bf16.msra.mxu0 %v736
    %751 = vmatmul.bf16.gmra.mxu0 %v741
    %v752 = vpop.f32.mrf.mxu0
    %v753 = vadd.f32 %v726, %v752
    %v754 = vpop.f32.mrf.mxu0
    %755 = vdwg.mxu0
    %vm756 = vcmask 58368
    %757 = vst.msk [vmem:[#allocation2] sm:$0x3] %vm756, %v753
    // Predicated region
    $region30: #{tpu_custom_call.1} parent=1 // pred_check
      _
    $region31: #{tpu_custom_call.1} parent=1 // pred_check_branch
      %759 = sbr.rel (0) target = $region33
    $region32: #{tpu_custom_call.1} parent=1 // pred_region
      %761 = vsyncadd [#allocation3], 0
      %s763 = sshll.u32 [#allocation2], 4
      %s764 = int_to_ptr.vmem [resolvable:$true] %s763
      %s765 = sshll.u32 %s7, 4
      %s766 = int_to_ptr.hbm [resolvable:$true] %s765
      %768 = dma.vmem_to_hbm [thread:$0]  %s764, 32, %s766, [#allocation3]
    $region33: #{tpu_custom_call.1} parent=1 // pred_fallthru
      _
    // Predicated region
    $region34: #{tpu_custom_call.1} parent=1 // pred_check
      _
    $region35: #{tpu_custom_call.1} parent=1 // pred_check_branch
      %770 = sbr.rel (0) target = $region37
    $region36: #{tpu_custom_call.1} parent=1 // pred_region
      %772 = dma.done [#allocation3], 32
    $region37: #{tpu_custom_call.1} parent=1 // pred_fallthru
      _
    %773 = vsyncpa [#allocation3], 1

</llo_original>
